<compile_context>
chip_gen: v5e
topology: v5e:2x2
jax: 0.10.0
libtpu: 0.0.40
codegen_flags: <defaults>
</compile_context>

<pallas_src>
import functools

import jax
import jax.numpy as jnp
from jax.experimental import pallas as pl
from jax.experimental.pallas import tpu as pltpu


def _round_up(n, m):
    return (n + m - 1) // m * m


def _pick_block_b(batch, width, max_rows=512):
    """Largest divisor of `batch` whose fused row count stays <= max_rows."""
    bb = 1
    for d in range(1, batch + 1):
        if batch % d == 0 and d * width <= max_rows:
            bb = d
    return bb


def _tds_kernel(xp_ref, cwk_ref, w1_ref, w2_ref, vec_ref, out_ref, *,
                bb, w_len, pad, ksize, chp):
    rows = bb * w_len
    xp = xp_ref[...]                                      # (bb, W+2*pad, CHp) f32

    # Residual input (time-center slab), flattened to matmul rows.
    x = xp[:, pad:pad + w_len, :].reshape(rows, chp)

    # im2col: k time-shifted slabs concatenated along lanes -> one deep matmul.
    xc = jnp.concatenate([xp[:, o:o + w_len, :] for o in range(ksize)],
                         axis=-1).reshape(rows, ksize * chp)
    h = jnp.dot(xc.astype(jnp.bfloat16), cwk_ref[...],
                preferred_element_type=jnp.float32)       # (rows, CHp)
    h = jnp.maximum(h + vec_ref[0:1, :], 0.0)             # conv bias + ReLU
    y1 = h + x                                            # residual (Dropout = id)

    def instance_norm(v, g_row, b_row):
        # InstanceNorm1d: per (batch, channel) statistics over the W axis,
        # biased variance, eps=1e-5, affine.
        v3 = v.reshape(bb, w_len, chp)
        mu = jnp.mean(v3, axis=1, keepdims=True)
        var = jnp.mean((v3 - mu) ** 2, axis=1, keepdims=True)
        vn = ((v3 - mu) * jax.lax.rsqrt(var + 1e-5)).reshape(rows, chp)
        return vn * vec_ref[g_row:g_row + 1, :] + vec_ref[b_row:b_row + 1, :]

    y1 = instance_norm(y1, 1, 2)

    # fc: Linear -> ReLU -> (Dropout) -> Linear -> (Dropout), then residual.
    f = jnp.dot(y1.astype(jnp.bfloat16), w1_ref[...],
                preferred_element_type=jnp.float32) + vec_ref[3:4, :]
    f = jnp.maximum(f, 0.0)
    f = jnp.dot(f.astype(jnp.bfloat16), w2_ref[...],
                preferred_element_type=jnp.float32) + vec_ref[4:5, :]
    y2 = instance_norm(f + y1, 5, 6)

    out_ref[...] = y2.reshape(bb, w_len, chp)


def tds_block_forward(x, params, *, in_channels, num_features, kernel_size):
    """x: (B, CH, W) float32 with CH == in_channels * num_features."""
    B, CH, W = x.shape
    C, H = in_channels, num_features
    assert CH == C * H
    k = kernel_size
    pad = k // 2
    CHp = _round_up(CH, 128)           # lane-dense feature width
    Bb = _pick_block_b(B, W)
    nb = B // Bb

    # ---- layout plumbing (glue; weights are batch-invariant) ----
    x_twc = jnp.transpose(x, (0, 2, 1))                        # (B, W, CH)
    xp = jnp.pad(x_twc, ((0, 0), (pad, pad), (0, CHp - CH)))   # (B, W+2p, CHp)

    # Conv2d(C, C, (1,k)) as an im2col matmul weight:
    #   cwk[o*CHp + c_in*H + h, c_out*H + h] = conv_w[c_out, c_in, 0, o]
    conv_w = params["conv_w"]                                  # (C, C, 1, k)
    eye_h = jnp.eye(H, dtype=jnp.float32)
    blocks = []
    for o in range(k):
        w_o = jnp.kron(conv_w[:, :, 0, o].T, eye_h)            # (CH, CH)
        blocks.append(jnp.pad(w_o, ((0, CHp - CH), (0, CHp - CH))))
    cwk = jnp.concatenate(blocks, axis=0).astype(jnp.bfloat16)  # (k*CHp, CHp)

    w1 = jnp.pad(params["fc1_w"].T,
                 ((0, CHp - CH), (0, CHp - CH))).astype(jnp.bfloat16)
    w2 = jnp.pad(params["fc2_w"].T,
                 ((0, CHp - CH), (0, CHp - CH))).astype(jnp.bfloat16)

    padv = lambda v: jnp.pad(v.astype(jnp.float32), (0, CHp - CH))
    vecs = jnp.stack([
        padv(jnp.repeat(params["conv_b"], H)),          # 0: conv bias per feature
        padv(params["in1_g"]), padv(params["in1_b"]),   # 1, 2: InstanceNorm 1
        padv(params["fc1_b"]), padv(params["fc2_b"]),   # 3, 4: FC biases
        padv(params["in2_g"]), padv(params["in2_b"]),   # 5, 6: InstanceNorm 2
        jnp.zeros((CHp,), jnp.float32),                 # 7: sublane-align pad row
    ], axis=0)                                          # (8, CHp) f32

    kern = functools.partial(_tds_kernel, bb=Bb, w_len=W, pad=pad,
                             ksize=k, chp=CHp)
    Wp = W + 2 * pad

    out = pl.pallas_call(
        kern,
        out_shape=jax.ShapeDtypeStruct((B, W, CHp), jnp.float32),
        grid_spec=pltpu.PrefetchScalarGridSpec(
            num_scalar_prefetch=0,
            grid=(nb,),
            in_specs=[
                pl.BlockSpec((Bb, Wp, CHp), lambda i: (i, 0, 0)),   # padded input
                pl.BlockSpec((k * CHp, CHp), lambda i: (0, 0)),     # im2col conv w
                pl.BlockSpec((CHp, CHp), lambda i: (0, 0)),         # fc1 w
                pl.BlockSpec((CHp, CHp), lambda i: (0, 0)),         # fc2 w
                pl.BlockSpec((8, CHp), lambda i: (0, 0)),           # packed vectors
            ],
            out_specs=pl.BlockSpec((Bb, W, CHp), lambda i: (i, 0, 0)),
        ),
        compiler_params=pltpu.CompilerParams(
            dimension_semantics=("parallel",)),
    )(xp, cwk, w1, w2, vecs)

    # un-pad features + back to PyTorch (B, CH, W) layout (glue)
    return jnp.transpose(out[:, :, :CH], (0, 2, 1))


# ----------------------------- reference & init ------------------------------

def tds_block_reference(x, params, *, in_channels, num_features, kernel_size):
    B, CH, W = x.shape
    C, H = in_channels, num_features
    k = kernel_size
    pad = k // 2
    x4 = x.reshape(B, C, H, W)
    xpad = jnp.pad(x4, ((0, 0), (0, 0), (0, 0), (pad, pad)))
    conv = jnp.zeros((B, C, H, W), jnp.float32)
    for o in range(k):
        conv = conv + jnp.einsum("oi,bihw->bohw", params["conv_w"][:, :, 0, o],
                                 xpad[:, :, :, o:o + W])
    conv = conv + params["conv_b"][None, :, None, None]
    y = jnp.maximum(conv, 0.0).reshape(B, CH, W) + x

    def inorm(v, g, b):
        mu = jnp.mean(v, axis=2, keepdims=True)
        var = jnp.mean((v - mu) ** 2, axis=2, keepdims=True)
        return (v - mu) / jnp.sqrt(var + 1e-5) * g[None, :, None] + b[None, :, None]

    y = inorm(y, params["in1_g"], params["in1_b"])
    z = jnp.swapaxes(y, 1, 2)                                    # (B, W, CH)
    f = jnp.maximum(z @ params["fc1_w"].T + params["fc1_b"], 0.0)
    f = f @ params["fc2_w"].T + params["fc2_b"]
    y2 = jnp.swapaxes(f, 1, 2) + y
    return inorm(y2, params["in2_g"], params["in2_b"])


def init_params(key, in_channels, num_features, kernel_size):
    C, H, k = in_channels, num_features, kernel_size
    CH = C * H
    ks = jax.random.split(key, 10)
    u = lambda kk, shape, lo, hi: jax.random.uniform(kk, shape, jnp.float32, lo, hi)
    cb = 1.0 / (C * k) ** 0.5
    fb = 1.0 / CH ** 0.5
    return {
        "conv_w": u(ks[0], (C, C, 1, k), -cb, cb),
        "conv_b": u(ks[1], (C,), -cb, cb),
        "fc1_w": u(ks[2], (CH, CH), -fb, fb),
        "fc1_b": u(ks[3], (CH,), -fb, fb),
        "fc2_w": u(ks[4], (CH, CH), -fb, fb),
        "fc2_b": u(ks[5], (CH,), -fb, fb),
        "in1_g": u(ks[6], (CH,), 0.5, 1.5),
        "in1_b": u(ks[7], (CH,), -0.5, 0.5),
        "in2_g": u(ks[8], (CH,), 0.5, 1.5),
        "in2_b": u(ks[9], (CH,), -0.5, 0.5),
    }


if __name__ == "__main__":
    # Small shapes consistent with the module: input (B, CH, W), CH = C * H.
    B, C, H, W, K = 2, 4, 8, 16, 5
    CH = C * H

    key = jax.random.PRNGKey(0)
    kx, kp = jax.random.split(key)
    x = jax.random.normal(kx, (B, CH, W), jnp.float32)
    params = init_params(kp, C, H, K)

    fwd = jax.jit(functools.partial(tds_block_forward, in_channels=C,
                                    num_features=H, kernel_size=K))
    out = fwd(x, params)
    jax.block_until_ready(out)
    assert out.shape == (B, CH, W)

    ref = tds_block_reference(x, params, in_channels=C, num_features=H,
                              kernel_size=K)
    err = float(jnp.max(jnp.abs(out - ref)))
    assert err < 1e-1, f"max abs err {err}"   # loose tol: bf16 matmul operands
    print("KERNEL_OK")
</pallas_src>

<mosaic_0001>
module attributes {stable_mosaic.version = 11 : i64} {
  func.func @_tds_kernel(%arg0: i32, %arg1: memref<2x20x128xf32, #tpu.memory_space<vmem>>, %arg2: memref<640x128xbf16, #tpu.memory_space<vmem>>, %arg3: memref<128x128xbf16, #tpu.memory_space<vmem>>, %arg4: memref<128x128xbf16, #tpu.memory_space<vmem>>, %arg5: memref<8x128xf32, #tpu.memory_space<vmem>>, %arg6: memref<2x16x128xf32, #tpu.memory_space<vmem>>) attributes {dimension_semantics = [#tpu.dimension_semantics<parallel>], iteration_bounds = array<i64: 1>, scalar_prefetch = 0 : i64, scratch_operands = 0 : i64, tpu.core_type = #tpu.core_type<tc>, window_params = [{transform_indices = @transform_0, window_bounds = array<i64: 2, 20, 128>}, {pipeline_mode = #tpu.pipeline_mode<synchronous>, transform_indices = @transform_1, window_bounds = array<i64: 640, 128>}, {pipeline_mode = #tpu.pipeline_mode<synchronous>, transform_indices = @transform_2, window_bounds = array<i64: 128, 128>}, {pipeline_mode = #tpu.pipeline_mode<synchronous>, transform_indices = @transform_3, window_bounds = array<i64: 128, 128>}, {pipeline_mode = #tpu.pipeline_mode<synchronous>, transform_indices = @transform_4, window_bounds = array<i64: 8, 128>}, {transform_indices = @transform_5, window_bounds = array<i64: 2, 16, 128>}]} {
    %c0 = arith.constant 0 : index
    %c0_0 = arith.constant 0 : index
    %c0_1 = arith.constant 0 : index
    %0 = vector.load %arg1[%c0, %c0_0, %c0_1] : memref<2x20x128xf32, #tpu.memory_space<vmem>>, vector<2x20x128xf32>
    %1 = vector.extract_strided_slice %0 {offsets = [0, 2, 0], sizes = [2, 16, 128], strides = [1, 1, 1]} : vector<2x20x128xf32> to vector<2x16x128xf32>
    %2 = vector.shape_cast %1 : vector<2x16x128xf32> to vector<32x128xf32>
    %3 = vector.extract_strided_slice %0 {offsets = [0, 0, 0], sizes = [2, 16, 128], strides = [1, 1, 1]} : vector<2x20x128xf32> to vector<2x16x128xf32>
    %4 = vector.extract_strided_slice %0 {offsets = [0, 1, 0], sizes = [2, 16, 128], strides = [1, 1, 1]} : vector<2x20x128xf32> to vector<2x16x128xf32>
    %5 = vector.extract_strided_slice %0 {offsets = [0, 2, 0], sizes = [2, 16, 128], strides = [1, 1, 1]} : vector<2x20x128xf32> to vector<2x16x128xf32>
    %6 = vector.extract_strided_slice %0 {offsets = [0, 3, 0], sizes = [2, 16, 128], strides = [1, 1, 1]} : vector<2x20x128xf32> to vector<2x16x128xf32>
    %7 = vector.extract_strided_slice %0 {offsets = [0, 4, 0], sizes = [2, 16, 128], strides = [1, 1, 1]} : vector<2x20x128xf32> to vector<2x16x128xf32>
    %8 = tpu.concatenate %3, %4, %5, %6, %7 in 2 : vector<2x16x128xf32>, vector<2x16x128xf32>, vector<2x16x128xf32>, vector<2x16x128xf32>, vector<2x16x128xf32> -> vector<2x16x640xf32>
    %9 = vector.shape_cast %8 : vector<2x16x640xf32> to vector<32x640xf32>
    %10 = arith.truncf %9 : vector<32x640xf32> to vector<32x640xbf16>
    %c0_2 = arith.constant 0 : index
    %c0_3 = arith.constant 0 : index
    %11 = vector.load %arg2[%c0_2, %c0_3] : memref<640x128xbf16, #tpu.memory_space<vmem>>, vector<640x128xbf16>
    %cst = arith.constant dense<0.000000e+00> : vector<32x128xf32>
    %12 = tpu.matmul %10, %11, %cst {dimension_numbers = #tpu.dot_dimension_numbers<[1], [0], [0], [1], [0, 0, 1, 1], [], []>} : vector<32x640xbf16>, vector<640x128xbf16>, vector<32x128xf32> -> vector<32x128xf32>
    %c0_4 = arith.constant 0 : index
    %c0_5 = arith.constant 0 : index
    %13 = vector.load %arg5[%c0_4, %c0_5] : memref<8x128xf32, #tpu.memory_space<vmem>>, vector<1x128xf32>
    %14 = vector.broadcast %13 : vector<1x128xf32> to vector<32x128xf32>
    %15 = arith.addf %12, %14 : vector<32x128xf32>
    %cst_6 = arith.constant 0.000000e+00 : f32
    %16 = vector.broadcast %cst_6 : f32 to vector<32x128xf32>
    %17 = arith.maximumf %15, %16 : vector<32x128xf32>
    %18 = arith.addf %17, %2 : vector<32x128xf32>
    %19 = vector.shape_cast %18 : vector<32x128xf32> to vector<2x16x128xf32>
    %cst_7 = arith.constant dense<0.000000e+00> : vector<2x128xf32>
    %20 = vector.multi_reduction <add>, %19, %cst_7 [1] : vector<2x16x128xf32> to vector<2x128xf32>
    %21 = vector.shape_cast %20 : vector<2x128xf32> to vector<2x1x128xf32>
    %cst_8 = arith.constant 1.600000e+01 : f32
    %22 = vector.broadcast %cst_8 : f32 to vector<2x1x128xf32>
    %23 = arith.divf %21, %22 : vector<2x1x128xf32>
    %24 = vector.broadcast %23 : vector<2x1x128xf32> to vector<2x16x128xf32>
    %25 = arith.subf %19, %24 : vector<2x16x128xf32>
    %26 = arith.mulf %25, %25 : vector<2x16x128xf32>
    %cst_9 = arith.constant dense<0.000000e+00> : vector<2x128xf32>
    %27 = vector.multi_reduction <add>, %26, %cst_9 [1] : vector<2x16x128xf32> to vector<2x128xf32>
    %28 = vector.shape_cast %27 : vector<2x128xf32> to vector<2x1x128xf32>
    %cst_10 = arith.constant 1.600000e+01 : f32
    %29 = vector.broadcast %cst_10 : f32 to vector<2x1x128xf32>
    %30 = arith.divf %28, %29 : vector<2x1x128xf32>
    %31 = vector.broadcast %23 : vector<2x1x128xf32> to vector<2x16x128xf32>
    %32 = arith.subf %19, %31 : vector<2x16x128xf32>
    %cst_11 = arith.constant 9.99999974E-6 : f32
    %33 = vector.broadcast %cst_11 : f32 to vector<2x1x128xf32>
    %34 = arith.addf %30, %33 : vector<2x1x128xf32>
    %35 = math.rsqrt %34 : vector<2x1x128xf32>
    %36 = vector.broadcast %35 : vector<2x1x128xf32> to vector<2x16x128xf32>
    %37 = arith.mulf %32, %36 : vector<2x16x128xf32>
    %38 = vector.shape_cast %37 : vector<2x16x128xf32> to vector<32x128xf32>
    %c1 = arith.constant 1 : index
    %c0_12 = arith.constant 0 : index
    %39 = vector.load %arg5[%c1, %c0_12] : memref<8x128xf32, #tpu.memory_space<vmem>>, vector<1x128xf32>
    %40 = vector.broadcast %39 : vector<1x128xf32> to vector<32x128xf32>
    %41 = arith.mulf %38, %40 : vector<32x128xf32>
    %c2 = arith.constant 2 : index
    %c0_13 = arith.constant 0 : index
    %42 = vector.load %arg5[%c2, %c0_13] : memref<8x128xf32, #tpu.memory_space<vmem>>, vector<1x128xf32>
    %43 = vector.broadcast %42 : vector<1x128xf32> to vector<32x128xf32>
    %44 = arith.addf %41, %43 : vector<32x128xf32>
    %45 = arith.truncf %44 : vector<32x128xf32> to vector<32x128xbf16>
    %c0_14 = arith.constant 0 : index
    %c0_15 = arith.constant 0 : index
    %46 = vector.load %arg3[%c0_14, %c0_15] : memref<128x128xbf16, #tpu.memory_space<vmem>>, vector<128x128xbf16>
    %cst_16 = arith.constant dense<0.000000e+00> : vector<32x128xf32>
    %47 = tpu.matmul %45, %46, %cst_16 {dimension_numbers = #tpu.dot_dimension_numbers<[1], [0], [0], [1], [0, 0, 1, 1], [], []>} : vector<32x128xbf16>, vector<128x128xbf16>, vector<32x128xf32> -> vector<32x128xf32>
    %c3 = arith.constant 3 : index
    %c0_17 = arith.constant 0 : index
    %48 = vector.load %arg5[%c3, %c0_17] : memref<8x128xf32, #tpu.memory_space<vmem>>, vector<1x128xf32>
    %49 = vector.broadcast %48 : vector<1x128xf32> to vector<32x128xf32>
    %50 = arith.addf %47, %49 : vector<32x128xf32>
    %cst_18 = arith.constant 0.000000e+00 : f32
    %51 = vector.broadcast %cst_18 : f32 to vector<32x128xf32>
    %52 = arith.maximumf %50, %51 : vector<32x128xf32>
    %53 = arith.truncf %52 : vector<32x128xf32> to vector<32x128xbf16>
    %c0_19 = arith.constant 0 : index
    %c0_20 = arith.constant 0 : index
    %54 = vector.load %arg4[%c0_19, %c0_20] : memref<128x128xbf16, #tpu.memory_space<vmem>>, vector<128x128xbf16>
    %cst_21 = arith.constant dense<0.000000e+00> : vector<32x128xf32>
    %55 = tpu.matmul %53, %54, %cst_21 {dimension_numbers = #tpu.dot_dimension_numbers<[1], [0], [0], [1], [0, 0, 1, 1], [], []>} : vector<32x128xbf16>, vector<128x128xbf16>, vector<32x128xf32> -> vector<32x128xf32>
    %c4 = arith.constant 4 : index
    %c0_22 = arith.constant 0 : index
    %56 = vector.load %arg5[%c4, %c0_22] : memref<8x128xf32, #tpu.memory_space<vmem>>, vector<1x128xf32>
    %57 = vector.broadcast %56 : vector<1x128xf32> to vector<32x128xf32>
    %58 = arith.addf %55, %57 : vector<32x128xf32>
    %59 = arith.addf %58, %44 : vector<32x128xf32>
    %60 = vector.shape_cast %59 : vector<32x128xf32> to vector<2x16x128xf32>
    %cst_23 = arith.constant dense<0.000000e+00> : vector<2x128xf32>
    %61 = vector.multi_reduction <add>, %60, %cst_23 [1] : vector<2x16x128xf32> to vector<2x128xf32>
    %62 = vector.shape_cast %61 : vector<2x128xf32> to vector<2x1x128xf32>
    %cst_24 = arith.constant 1.600000e+01 : f32
    %63 = vector.broadcast %cst_24 : f32 to vector<2x1x128xf32>
    %64 = arith.divf %62, %63 : vector<2x1x128xf32>
    %65 = vector.broadcast %64 : vector<2x1x128xf32> to vector<2x16x128xf32>
    %66 = arith.subf %60, %65 : vector<2x16x128xf32>
    %67 = arith.mulf %66, %66 : vector<2x16x128xf32>
    %cst_25 = arith.constant dense<0.000000e+00> : vector<2x128xf32>
    %68 = vector.multi_reduction <add>, %67, %cst_25 [1] : vector<2x16x128xf32> to vector<2x128xf32>
    %69 = vector.shape_cast %68 : vector<2x128xf32> to vector<2x1x128xf32>
    %cst_26 = arith.constant 1.600000e+01 : f32
    %70 = vector.broadcast %cst_26 : f32 to vector<2x1x128xf32>
    %71 = arith.divf %69, %70 : vector<2x1x128xf32>
    %72 = vector.broadcast %64 : vector<2x1x128xf32> to vector<2x16x128xf32>
    %73 = arith.subf %60, %72 : vector<2x16x128xf32>
    %cst_27 = arith.constant 9.99999974E-6 : f32
    %74 = vector.broadcast %cst_27 : f32 to vector<2x1x128xf32>
    %75 = arith.addf %71, %74 : vector<2x1x128xf32>
    %76 = math.rsqrt %75 : vector<2x1x128xf32>
    %77 = vector.broadcast %76 : vector<2x1x128xf32> to vector<2x16x128xf32>
    %78 = arith.mulf %73, %77 : vector<2x16x128xf32>
    %79 = vector.shape_cast %78 : vector<2x16x128xf32> to vector<32x128xf32>
    %c5 = arith.constant 5 : index
    %c0_28 = arith.constant 0 : index
    %80 = vector.load %arg5[%c5, %c0_28] : memref<8x128xf32, #tpu.memory_space<vmem>>, vector<1x128xf32>
    %81 = vector.broadcast %80 : vector<1x128xf32> to vector<32x128xf32>
    %82 = arith.mulf %79, %81 : vector<32x128xf32>
    %c6 = arith.constant 6 : index
    %c0_29 = arith.constant 0 : index
    %83 = vector.load %arg5[%c6, %c0_29] : memref<8x128xf32, #tpu.memory_space<vmem>>, vector<1x128xf32>
    %84 = vector.broadcast %83 : vector<1x128xf32> to vector<32x128xf32>
    %85 = arith.addf %82, %84 : vector<32x128xf32>
    %86 = vector.shape_cast %85 : vector<32x128xf32> to vector<2x16x128xf32>
    %c0_30 = arith.constant 0 : index
    %c0_31 = arith.constant 0 : index
    %c0_32 = arith.constant 0 : index
    %87 = vector.load %arg6[%c0_30, %c0_31, %c0_32] : memref<2x16x128xf32, #tpu.memory_space<vmem>>, vector<2x16x128xf32>
    tpu.vector_store %arg6[%c0_30, %c0_31, %c0_32], %86 {strides = array<i32>} : memref<2x16x128xf32, #tpu.memory_space<vmem>>, vector<2x16x128xf32>,
    return
  }
  func.func @transform_0(%arg0: i32) -> (i32, i32, i32) {
    %c0_i32 = arith.constant 0 : i32
    %c0_i32_0 = arith.constant 0 : i32
    %c0_i32_1 = arith.constant 0 : i32
    return %arg0, %c0_i32, %c0_i32_0 : i32, i32, i32
  }
  func.func @transform_1(%arg0: i32) -> (i32, i32) {
    %c0_i32 = arith.constant 0 : i32
    %c0_i32_0 = arith.constant 0 : i32
    %c0_i32_1 = arith.constant 0 : i32
    return %c0_i32, %c0_i32_0 : i32, i32
  }
  func.func @transform_2(%arg0: i32) -> (i32, i32) {
    %c0_i32 = arith.constant 0 : i32
    %c0_i32_0 = arith.constant 0 : i32
    %c0_i32_1 = arith.constant 0 : i32
    return %c0_i32, %c0_i32_0 : i32, i32
  }
  func.func @transform_3(%arg0: i32) -> (i32, i32) {
    %c0_i32 = arith.constant 0 : i32
    %c0_i32_0 = arith.constant 0 : i32
    %c0_i32_1 = arith.constant 0 : i32
    return %c0_i32, %c0_i32_0 : i32, i32
  }
  func.func @transform_4(%arg0: i32) -> (i32, i32) {
    %c0_i32 = arith.constant 0 : i32
    %c0_i32_0 = arith.constant 0 : i32
    %c0_i32_1 = arith.constant 0 : i32
    return %c0_i32, %c0_i32_0 : i32, i32
  }
  func.func @transform_5(%arg0: i32) -> (i32, i32, i32) {
    %c0_i32 = arith.constant 0 : i32
    %c0_i32_0 = arith.constant 0 : i32
    %c0_i32_1 = arith.constant 0 : i32
    return %arg0, %c0_i32, %c0_i32_0 : i32, i32, i32
  }
}

</mosaic_0001>

<llo_original>
// kernel: tds_block_forward.1
$region0: #{tds_block_forward.1}
  #allocation0 [shape = 'u32[]', space=smem, size = 0x4, offset = 0x4, fixed_abs, tag = 'smem constant byte address 0x4 - core index']
  #allocation1 [shape = 'u32[72,128]{1,0:T(1,128)}', space=vmem, size = 0x9000, scoped, tag = 'internal scratch']
  %s0 = inlined_call_operand.vmem [shape: f32[2,20,128], index: 0, kind: input, shape index: {}]
  %s1 = inlined_call_operand.vmem [shape: bf16[640,128], index: 1, kind: input, shape index: {}]
  %s2 = inlined_call_operand.vmem [shape: bf16[128,128], index: 2, kind: input, shape index: {}]
  %s3 = inlined_call_operand.vmem [shape: bf16[128,128], index: 3, kind: input, shape index: {}]
  %s4 = inlined_call_operand.vmem [shape: f32[8,128], index: 4, kind: input, shape index: {}]
  %s5 = inlined_call_operand.vmem [shape: f32[2,16,128], index: 5, kind: output, shape index: {}]
  %s6 = sld [smem:[#allocation0]]
  $region30: #{tds_block_forward.1} parent=0
    _
  %s8 = ssub.s32 1, %s6
  %s9 = scalar_select 0, %s8, %s6
  // Predicated region
  $region2: #{tds_block_forward.1} parent=0 // pred_check
    _
  $region3: #{tds_block_forward.1} parent=0 // pred_check_branch
    %11 = sbr.rel (0) target = $region5
  $region4: #{tds_block_forward.1} parent=0 // pred_region
    _
  $region5: #{tds_block_forward.1} parent=0 // pred_fallthru
    _
  // Predicated region
  $region6: #{tds_block_forward.1} parent=0 // pred_check
    _
  $region7: #{tds_block_forward.1} parent=0 // pred_check_branch
    %13 = sbr.rel (0) target = $region9
  $region8: #{tds_block_forward.1} parent=0 // pred_region
    _
  $region9: #{tds_block_forward.1} parent=0 // pred_fallthru
    _
  // Predicated region
  $region10: #{tds_block_forward.1} parent=0 // pred_check
    _
  $region11: #{tds_block_forward.1} parent=0 // pred_check_branch
    %15 = sbr.rel (0) target = $region13
  $region12: #{tds_block_forward.1} parent=0 // pred_region
    _
  $region13: #{tds_block_forward.1} parent=0 // pred_fallthru
    _
  // Predicated region
  $region14: #{tds_block_forward.1} parent=0 // pred_check
    _
  $region15: #{tds_block_forward.1} parent=0 // pred_check_branch
    %17 = sbr.rel (0) target = $region17
  $region16: #{tds_block_forward.1} parent=0 // pred_region
    _
  $region17: #{tds_block_forward.1} parent=0 // pred_fallthru
    _
  // Predicated region
  $region18: #{tds_block_forward.1} parent=0 // pred_check
    _
  $region19: #{tds_block_forward.1} parent=0 // pred_check_branch
    %19 = sbr.rel (0) target = $region21
  $region20: #{tds_block_forward.1} parent=0 // pred_region
    _
  $region21: #{tds_block_forward.1} parent=0 // pred_fallthru
    _
  %v20 = vld [vmem:[%s0] sm:$0xff]
  %v21 = vld [vmem:[%s0 + $0x8] sm:$0xff]
  %v22 = vld [vmem:[%s0 + $0x10] sm:$0xf]
  %v23 = vld [vmem:[%s0 + $0x18] sm:$0xff]
  %v24 = vld [vmem:[%s0 + $0x20] sm:$0xff]
  %v25 = vld [vmem:[%s0 + $0x28] sm:$0xf]
  %vm32 = vcmask 1045504
  %v33 = vrot.slane %v20, 2
  %v34 = vrot.slane %v21, 2
  %v35 = vsel %vm32, %v33, %v34
  %v36 = vrot.slane %v22, 2
  %v37 = vsel %vm32, %v34, %v36
  %v38 = vrot.slane %v23, 2
  %v39 = vrot.slane %v24, 2
  %v40 = vsel %vm32, %v38, %v39
  %v41 = vrot.slane %v25, 2
  %v42 = vsel %vm32, %v39, %v41
  %vm47 = vcmask 1046528
  %v48 = vrot.slane %v20, 1
  %v49 = vrot.slane %v21, 1
  %v50 = vsel %vm47, %v48, %v49
  %v51 = vrot.slane %v22, 1
  %v52 = vsel %vm47, %v49, %v51
  %v53 = vrot.slane %v23, 1
  %v54 = vrot.slane %v24, 1
  %v55 = vsel %vm47, %v53, %v54
  %v56 = vrot.slane %v25, 1
  %v57 = vsel %vm47, %v54, %v56
  %vm62 = vcmask 1044480
  %v63 = vrot.slane %v20, 3
  %v64 = vrot.slane %v21, 3
  %v65 = vsel %vm62, %v63, %v64
  %v66 = vrot.slane %v22, 3
  %v67 = vsel %vm62, %v64, %v66
  %v68 = vrot.slane %v23, 3
  %v69 = vrot.slane %v24, 3
  %v70 = vsel %vm62, %v68, %v69
  %v71 = vrot.slane %v25, 3
  %v72 = vsel %vm62, %v69, %v71
  %vm77 = vcmask 1043456
  %v78 = vrot.slane %v20, 4
  %v79 = vrot.slane %v21, 4
  %v80 = vsel %vm77, %v78, %v79
  %v81 = vrot.slane %v22, 4
  %v82 = vsel %vm77, %v79, %v81
  %v83 = vrot.slane %v23, 4
  %v84 = vrot.slane %v24, 4
  %v85 = vsel %vm77, %v83, %v84
  %v86 = vrot.slane %v25, 4
  %v87 = vsel %vm77, %v84, %v86
  %v92 = vpack.c.bf16 %v21, %v20
  %v93 = vpack.c.bf16 %v52, %v50
  %v94 = vpack.c.bf16 %v37, %v35
  %v95 = vpack.c.bf16 %v67, %v65
  %v96 = vpack.c.bf16 %v82, %v80
  %v97 = vpack.c.bf16 %v24, %v23
  %v98 = vpack.c.bf16 %v57, %v55
  %v99 = vpack.c.bf16 %v42, %v40
  %v100 = vpack.c.bf16 %v72, %v70
  %v101 = vpack.c.bf16 %v87, %v85
  %v102 = vld [vmem:[%s1] sm:$0xf]
  %v103 = vld [vmem:[%s1 + $0x4] sm:$0xf]
  %v104 = vld [vmem:[%s1 + $0x8] sm:$0xf]
  %v105 = vld [vmem:[%s1 + $0xc] sm:$0xf]
  %v106 = vld [vmem:[%s1 + $0x10] sm:$0xf]
  %v107 = vld [vmem:[%s1 + $0x14] sm:$0xf]
  %v108 = vld [vmem:[%s1 + $0x18] sm:$0xf]
  %v109 = vld [vmem:[%s1 + $0x1c] sm:$0xf]
  %v110 = vld [vmem:[%s1 + $0x20] sm:$0xf]
  %v111 = vld [vmem:[%s1 + $0x24] sm:$0xf]
  %v112 = vld [vmem:[%s1 + $0x28] sm:$0xf]
  %v113 = vld [vmem:[%s1 + $0x2c] sm:$0xf]
  %v114 = vld [vmem:[%s1 + $0x30] sm:$0xf]
  %v115 = vld [vmem:[%s1 + $0x34] sm:$0xf]
  %v116 = vld [vmem:[%s1 + $0x38] sm:$0xf]
  %v117 = vld [vmem:[%s1 + $0x3c] sm:$0xf]
  %v118 = vld [vmem:[%s1 + $0x40] sm:$0xf]
  %v119 = vld [vmem:[%s1 + $0x44] sm:$0xf]
  %v120 = vld [vmem:[%s1 + $0x48] sm:$0xf]
  %v121 = vld [vmem:[%s1 + $0x4c] sm:$0xf]
  %v122 = vld [vmem:[%s1 + $0x50] sm:$0xf]
  %v123 = vld [vmem:[%s1 + $0x54] sm:$0xf]
  %v124 = vld [vmem:[%s1 + $0x58] sm:$0xf]
  %v125 = vld [vmem:[%s1 + $0x5c] sm:$0xf]
  %v126 = vld [vmem:[%s1 + $0x60] sm:$0xf]
  %v127 = vld [vmem:[%s1 + $0x64] sm:$0xf]
  %v128 = vld [vmem:[%s1 + $0x68] sm:$0xf]
  %v129 = vld [vmem:[%s1 + $0x6c] sm:$0xf]
  %v130 = vld [vmem:[%s1 + $0x70] sm:$0xf]
  %v131 = vld [vmem:[%s1 + $0x74] sm:$0xf]
  %v132 = vld [vmem:[%s1 + $0x78] sm:$0xf]
  %v133 = vld [vmem:[%s1 + $0x7c] sm:$0xf]
  %v134 = vld [vmem:[%s1 + $0x80] sm:$0xf]
  %v135 = vld [vmem:[%s1 + $0x84] sm:$0xf]
  %v136 = vld [vmem:[%s1 + $0x88] sm:$0xf]
  %v137 = vld [vmem:[%s1 + $0x8c] sm:$0xf]
  %v138 = vld [vmem:[%s1 + $0x90] sm:$0xf]
  %v139 = vld [vmem:[%s1 + $0x94] sm:$0xf]
  %v140 = vld [vmem:[%s1 + $0x98] sm:$0xf]
  %v141 = vld [vmem:[%s1 + $0x9c] sm:$0xf]
  %v142 = vld [vmem:[%s1 + $0xa0] sm:$0xf]
  %v143 = vld [vmem:[%s1 + $0xa4] sm:$0xf]
  %v144 = vld [vmem:[%s1 + $0xa8] sm:$0xf]
  %v145 = vld [vmem:[%s1 + $0xac] sm:$0xf]
  %v146 = vld [vmem:[%s1 + $0xb0] sm:$0xf]
  %v147 = vld [vmem:[%s1 + $0xb4] sm:$0xf]
  %v148 = vld [vmem:[%s1 + $0xb8] sm:$0xf]
  %v149 = vld [vmem:[%s1 + $0xbc] sm:$0xf]
  %v150 = vld [vmem:[%s1 + $0xc0] sm:$0xf]
  %v151 = vld [vmem:[%s1 + $0xc4] sm:$0xf]
  %v152 = vld [vmem:[%s1 + $0xc8] sm:$0xf]
  %v153 = vld [vmem:[%s1 + $0xcc] sm:$0xf]
  %v154 = vld [vmem:[%s1 + $0xd0] sm:$0xf]
  %v155 = vld [vmem:[%s1 + $0xd4] sm:$0xf]
  %v156 = vld [vmem:[%s1 + $0xd8] sm:$0xf]
  %v157 = vld [vmem:[%s1 + $0xdc] sm:$0xf]
  %v158 = vld [vmem:[%s1 + $0xe0] sm:$0xf]
  %v159 = vld [vmem:[%s1 + $0xe4] sm:$0xf]
  %v160 = vld [vmem:[%s1 + $0xe8] sm:$0xf]
  %v161 = vld [vmem:[%s1 + $0xec] sm:$0xf]
  %v162 = vld [vmem:[%s1 + $0xf0] sm:$0xf]
  %v163 = vld [vmem:[%s1 + $0xf4] sm:$0xf]
  %v164 = vld [vmem:[%s1 + $0xf8] sm:$0xf]
  %v165 = vld [vmem:[%s1 + $0xfc] sm:$0xf]
  %v166 = vld [vmem:[%s1 + $0x100] sm:$0xf]
  %v167 = vld [vmem:[%s1 + $0x104] sm:$0xf]
  %v168 = vld [vmem:[%s1 + $0x108] sm:$0xf]
  %v169 = vld [vmem:[%s1 + $0x10c] sm:$0xf]
  %v170 = vld [vmem:[%s1 + $0x110] sm:$0xf]
  %v171 = vld [vmem:[%s1 + $0x114] sm:$0xf]
  %v172 = vld [vmem:[%s1 + $0x118] sm:$0xf]
  %v173 = vld [vmem:[%s1 + $0x11c] sm:$0xf]
  %v174 = vld [vmem:[%s1 + $0x120] sm:$0xf]
  %v175 = vld [vmem:[%s1 + $0x124] sm:$0xf]
  %v176 = vld [vmem:[%s1 + $0x128] sm:$0xf]
  %v177 = vld [vmem:[%s1 + $0x12c] sm:$0xf]
  %v178 = vld [vmem:[%s1 + $0x130] sm:$0xf]
  %v179 = vld [vmem:[%s1 + $0x134] sm:$0xf]
  %v180 = vld [vmem:[%s1 + $0x138] sm:$0xf]
  %v181 = vld [vmem:[%s1 + $0x13c] sm:$0xf]
  %v182 = vld [vmem:[%s4] sm:$0x1]
  %v183 = vperm.slane %v182, 0
  %v264 = vunpack.c.l.b16 %v102
  %v265 = vunpack.c.l.b16 %v103
  %v266 = vunpack.c.l.b16 %v104
  %v267 = vunpack.c.l.b16 %v105
  %v268 = vunpack.c.l.b16 %v106
  %v269 = vunpack.c.l.b16 %v107
  %v270 = vunpack.c.l.b16 %v108
  %v271 = vunpack.c.l.b16 %v109
  %v272 = vunpack.c.l.b16 %v110
  %v273 = vunpack.c.l.b16 %v111
  %v274 = vunpack.c.l.b16 %v112
  %v275 = vunpack.c.l.b16 %v113
  %v276 = vunpack.c.l.b16 %v114
  %v277 = vunpack.c.l.b16 %v115
  %v278 = vunpack.c.l.b16 %v116
  %v279 = vunpack.c.l.b16 %v117
  %v280 = vunpack.c.l.b16 %v118
  %v281 = vunpack.c.l.b16 %v119
  %v282 = vunpack.c.l.b16 %v120
  %v283 = vunpack.c.l.b16 %v121
  %v284 = vunpack.c.l.b16 %v122
  %v285 = vunpack.c.l.b16 %v123
  %v286 = vunpack.c.l.b16 %v124
  %v287 = vunpack.c.l.b16 %v125
  %v288 = vunpack.c.l.b16 %v126
  %v289 = vunpack.c.l.b16 %v127
  %v290 = vunpack.c.l.b16 %v128
  %v291 = vunpack.c.l.b16 %v129
  %v292 = vunpack.c.l.b16 %v130
  %v293 = vunpack.c.l.b16 %v131
  %v294 = vunpack.c.l.b16 %v132
  %v295 = vunpack.c.l.b16 %v133
  %v296 = vunpack.c.l.b16 %v134
  %v297 = vunpack.c.l.b16 %v135
  %v298 = vunpack.c.l.b16 %v136
  %v299 = vunpack.c.l.b16 %v137
  %v300 = vunpack.c.l.b16 %v138
  %v301 = vunpack.c.l.b16 %v139
  %v302 = vunpack.c.l.b16 %v140
  %v303 = vunpack.c.l.b16 %v141
  %v304 = vunpack.c.l.b16 %v142
  %v305 = vunpack.c.l.b16 %v143
  %v306 = vunpack.c.l.b16 %v144
  %v307 = vunpack.c.l.b16 %v145
  %v308 = vunpack.c.l.b16 %v146
  %v309 = vunpack.c.l.b16 %v147
  %v310 = vunpack.c.l.b16 %v148
  %v311 = vunpack.c.l.b16 %v149
  %v312 = vunpack.c.l.b16 %v150
  %v313 = vunpack.c.l.b16 %v151
  %v314 = vunpack.c.l.b16 %v152
  %v315 = vunpack.c.l.b16 %v153
  %v316 = vunpack.c.l.b16 %v154
  %v317 = vunpack.c.l.b16 %v155
  %v318 = vunpack.c.l.b16 %v156
  %v319 = vunpack.c.l.b16 %v157
  %v320 = vunpack.c.l.b16 %v158
  %v321 = vunpack.c.l.b16 %v159
  %v322 = vunpack.c.l.b16 %v160
  %v323 = vunpack.c.l.b16 %v161
  %v324 = vunpack.c.l.b16 %v162
  %v325 = vunpack.c.l.b16 %v163
  %v326 = vunpack.c.l.b16 %v164
  %v327 = vunpack.c.l.b16 %v165
  %v328 = vunpack.c.l.b16 %v166
  %v329 = vunpack.c.l.b16 %v167
  %v330 = vunpack.c.l.b16 %v168
  %v331 = vunpack.c.l.b16 %v169
  %v332 = vunpack.c.l.b16 %v170
  %v333 = vunpack.c.l.b16 %v171
  %v334 = vunpack.c.l.b16 %v172
  %v335 = vunpack.c.l.b16 %v173
  %v336 = vunpack.c.l.b16 %v174
  %v337 = vunpack.c.l.b16 %v175
  %v338 = vunpack.c.l.b16 %v176
  %v339 = vunpack.c.l.b16 %v177
  %v340 = vunpack.c.l.b16 %v178
  %v341 = vunpack.c.l.b16 %v179
  %v342 = vunpack.c.l.b16 %v180
  %v343 = vunpack.c.l.b16 %v181
  %v344 = vpack.c.b16 %v265, %v264
  %v345 = vpack.c.b16 %v267, %v266
  %v346 = vpack.c.b16 %v269, %v268
  %v347 = vpack.c.b16 %v271, %v270
  %v348 = vpack.c.b16 %v273, %v272
  %v349 = vpack.c.b16 %v275, %v274
  %v350 = vpack.c.b16 %v277, %v276
  %v351 = vpack.c.b16 %v279, %v278
  %v352 = vpack.c.b16 %v281, %v280
  %v353 = vpack.c.b16 %v283, %v282
  %v354 = vpack.c.b16 %v285, %v284
  %v355 = vpack.c.b16 %v287, %v286
  %v356 = vpack.c.b16 %v289, %v288
  %v357 = vpack.c.b16 %v291, %v290
  %v358 = vpack.c.b16 %v293, %v292
  %v359 = vpack.c.b16 %v295, %v294
  %v360 = vpack.c.b16 %v297, %v296
  %v361 = vpack.c.b16 %v299, %v298
  %v362 = vpack.c.b16 %v301, %v300
  %v363 = vpack.c.b16 %v303, %v302
  %v364 = vpack.c.b16 %v305, %v304
  %v365 = vpack.c.b16 %v307, %v306
  %v366 = vpack.c.b16 %v309, %v308
  %v367 = vpack.c.b16 %v311, %v310
  %v368 = vpack.c.b16 %v313, %v312
  %v369 = vpack.c.b16 %v315, %v314
  %v370 = vpack.c.b16 %v317, %v316
  %v371 = vpack.c.b16 %v319, %v318
  %v372 = vpack.c.b16 %v321, %v320
  %v373 = vpack.c.b16 %v323, %v322
  %v374 = vpack.c.b16 %v325, %v324
  %v375 = vpack.c.b16 %v327, %v326
  %v376 = vpack.c.b16 %v329, %v328
  %v377 = vpack.c.b16 %v331, %v330
  %v378 = vpack.c.b16 %v333, %v332
  %v379 = vpack.c.b16 %v335, %v334
  %v380 = vpack.c.b16 %v337, %v336
  %v381 = vpack.c.b16 %v339, %v338
  %v382 = vpack.c.b16 %v341, %v340
  %v383 = vpack.c.b16 %v343, %v342
  %424 = vmatpush.bf16.msra.mxu0 %v351
  %425 = vmatpush.bf16.msra.mxu0 %v350
  %426 = vmatpush.bf16.msra.mxu0 %v349
  %427 = vmatpush.bf16.msra.mxu0 %v348
  %428 = vmatpush.bf16.msra.mxu0 %v347
  %429 = vmatpush.bf16.msra.mxu0 %v346
  %430 = vmatpush.bf16.msra.mxu0 %v345
  %431 = vmatpush.bf16.msra.mxu0 %v344
  %432 = vmatmul.bf16.gmra.mxu0 %v92
  %v433 = vpop.f32.mrf.mxu0
  %v434 = vadd.f32 %v183, %v433
  %v435 = vpop.f32.mrf.mxu0
  %v436 = vadd.f32 %v183, %v435
  %437 = vmatmul.bf16.gmra.mxu0 %v97
  %v438 = vpop.f32.mrf.mxu0
  %v439 = vadd.f32 %v183, %v438
  %v440 = vpop.f32.mrf.mxu0
  %v441 = vadd.f32 %v183, %v440
  %442 = vdwg.mxu0
  %443 = vmatpush.bf16.msra.mxu0 %v359
  %444 = vmatpush.bf16.msra.mxu0 %v358
  %445 = vmatpush.bf16.msra.mxu0 %v357
  %446 = vmatpush.bf16.msra.mxu0 %v356
  %447 = vmatpush.bf16.msra.mxu0 %v355
  %448 = vmatpush.bf16.msra.mxu0 %v354
  %449 = vmatpush.bf16.msra.mxu0 %v353
  %450 = vmatpush.bf16.msra.mxu0 %v352
  %451 = vmatmul.bf16.gmra.mxu0 %v93
  %v452 = vpop.f32.mrf.mxu0
  %v453 = vadd.f32 %v434, %v452
  %v454 = vpop.f32.mrf.mxu0
  %v455 = vadd.f32 %v436, %v454
  %456 = vmatmul.bf16.gmra.mxu0 %v98
  %v457 = vpop.f32.mrf.mxu0
  %v458 = vadd.f32 %v439, %v457
  %v459 = vpop.f32.mrf.mxu0
  %v460 = vadd.f32 %v441, %v459
  %461 = vdwg.mxu0
  %462 = vmatpush.bf16.msra.mxu0 %v367
  %463 = vmatpush.bf16.msra.mxu0 %v366
  %464 = vmatpush.bf16.msra.mxu0 %v365
  %465 = vmatpush.bf16.msra.mxu0 %v364
  %466 = vmatpush.bf16.msra.mxu0 %v363
  %467 = vmatpush.bf16.msra.mxu0 %v362
  %468 = vmatpush.bf16.msra.mxu0 %v361
  %469 = vmatpush.bf16.msra.mxu0 %v360
  %470 = vmatmul.bf16.gmra.mxu0 %v94
  %v471 = vpop.f32.mrf.mxu0
  %v472 = vadd.f32 %v453, %v471
  %v473 = vpop.f32.mrf.mxu0
  %v474 = vadd.f32 %v455, %v473
  %475 = vmatmul.bf16.gmra.mxu0 %v99
  %v476 = vpop.f32.mrf.mxu0
  %v477 = vadd.f32 %v458, %v476
  %v478 = vpop.f32.mrf.mxu0
  %v479 = vadd.f32 %v460, %v478
  %480 = vdwg.mxu0
  %481 = vmatpush.bf16.msra.mxu0 %v375
  %482 = vmatpush.bf16.msra.mxu0 %v374
  %483 = vmatpush.bf16.msra.mxu0 %v373
  %484 = vmatpush.bf16.msra.mxu0 %v372
  %485 = vmatpush.bf16.msra.mxu0 %v371
  %486 = vmatpush.bf16.msra.mxu0 %v370
  %487 = vmatpush.bf16.msra.mxu0 %v369
  %488 = vmatpush.bf16.msra.mxu0 %v368
  %489 = vmatmul.bf16.gmra.mxu0 %v95
  %v490 = vpop.f32.mrf.mxu0
  %v491 = vadd.f32 %v472, %v490
  %v492 = vpop.f32.mrf.mxu0
  %v493 = vadd.f32 %v474, %v492
  %494 = vmatmul.bf16.gmra.mxu0 %v100
  %v495 = vpop.f32.mrf.mxu0
  %v496 = vadd.f32 %v477, %v495
  %v497 = vpop.f32.mrf.mxu0
  %v498 = vadd.f32 %v479, %v497
  %499 = vdwg.mxu0
  %500 = vmatpush.bf16.msra.mxu0 %v383
  %501 = vmatpush.bf16.msra.mxu0 %v382
  %502 = vmatpush.bf16.msra.mxu0 %v381
  %503 = vmatpush.bf16.msra.mxu0 %v380
  %504 = vmatpush.bf16.msra.mxu0 %v379
  %505 = vmatpush.bf16.msra.mxu0 %v378
  %506 = vmatpush.bf16.msra.mxu0 %v377
  %507 = vmatpush.bf16.msra.mxu0 %v376
  %508 = vmatmul.bf16.gmra.mxu0 %v96
  %v509 = vpop.f32.mrf.mxu0
  %v510 = vadd.f32 %v491, %v509
  %v511 = vpop.f32.mrf.mxu0
  %v512 = vadd.f32 %v493, %v511
  %513 = vmatmul.bf16.gmra.mxu0 %v101
  %v514 = vpop.f32.mrf.mxu0
  %v515 = vadd.f32 %v496, %v514
  %v516 = vpop.f32.mrf.mxu0
  %v517 = vadd.f32 %v498, %v516
  %518 = vdwg.mxu0
  %v519 = vmax.f32 %v510, 0.0
  %v520 = vmax.f32 %v512, 0.0
  %v521 = vmax.f32 %v515, 0.0
  %v522 = vmax.f32 %v517, 0.0
  %v523 = vadd.f32 %v519, %v35
  %v524 = vadd.f32 %v520, %v37
  %v525 = vadd.f32 %v521, %v40
  %v526 = vadd.f32 %v522, %v42
  %v527 = vadd.f32 %v523, %v524
  %v528 = vrot.slane %v527, 4
  %v529 = vadd.f32 %v527, %v528
  %v530 = vrot.slane %v529, 2
  %v531 = vadd.f32 %v529, %v530
  %v532 = vrot.slane %v531, 1
  %v533 = vadd.f32 %v531, %v532
  %v534 = vadd.f32 %v525, %v526
  %v535 = vrot.slane %v534, 4
  %v536 = vadd.f32 %v534, %v535
  %v537 = vrot.slane %v536, 2
  %v538 = vadd.f32 %v536, %v537
  %v539 = vrot.slane %v538, 1
  %v540 = vadd.f32 %v538, %v539
  %v541 = vrcp.pop 16.0
  %v542 = vmul.f32 16.0, %v541
  %v543 = vsub.f32 1.0, %v542
  %v544 = vmul.f32 %v541, %v543
  %v545 = vadd.f32 %v541, %v544
  %vm546 = vweird.f32 %v541
  %v547 = vsel %vm546, %v541, %v545
  %v548 = vmul.f32 %v533, %v547
  %v549 = vmul.f32 %v540, %v547
  %v550 = vsub.f32 %v523, %v548
  %v551 = vsub.f32 %v524, %v548
  %v552 = vsub.f32 %v525, %v549
  %v553 = vsub.f32 %v526, %v549
  %v554 = vmul.f32 %v550, %v550
  %v555 = vmul.f32 %v551, %v551
  %v556 = vmul.f32 %v552, %v552
  %v557 = vmul.f32 %v553, %v553
  %v558 = vadd.f32 %v554, %v555
  %v559 = vrot.slane %v558, 4
  %v560 = vadd.f32 %v558, %v559
  %v561 = vrot.slane %v560, 2
  %v562 = vadd.f32 %v560, %v561
  %v563 = vrot.slane %v562, 1
  %v564 = vadd.f32 %v562, %v563
  %v565 = vadd.f32 %v556, %v557
  %v566 = vrot.slane %v565, 4
  %v567 = vadd.f32 %v565, %v566
  %v568 = vrot.slane %v567, 2
  %v569 = vadd.f32 %v567, %v568
  %v570 = vrot.slane %v569, 1
  %v571 = vadd.f32 %v569, %v570
  %v572 = vmul.f32 %v564, %v547
  %v573 = vmul.f32 %v571, %v547
  %v574 = vadd.f32 %v572, 1e-05
  %v575 = vadd.f32 %v573, 1e-05
  %v576 = vrsqrt.pop %v574
  %v577 = vmul.f32 %v576, %v574
  %v578 = vmul.f32 %v577, %v576
  %v579 = vmul.f32 0.5, %v578
  %v580 = vsub.f32 1.5, %v579
  %v581 = vmul.f32 %v576, %v580
  %vm582 = vweird.f32 %v574
  %vm583 = vweird.f32 %v576
  %vm584 = vmor %vm582, %vm583
  %v585 = vsel %vm584, %v576, %v581
  %v586 = vrsqrt.pop %v575
  %v587 = vmul.f32 %v586, %v575
  %v588 = vmul.f32 %v587, %v586
  %v589 = vmul.f32 0.5, %v588
  %v590 = vsub.f32 1.5, %v589
  %v591 = vmul.f32 %v586, %v590
  %vm592 = vweird.f32 %v575
  %vm593 = vweird.f32 %v586
  %vm594 = vmor %vm592, %vm593
  %v595 = vsel %vm594, %v586, %v591
  %v596 = vmul.f32 %v550, %v585
  %v597 = vmul.f32 %v551, %v585
  %v598 = vmul.f32 %v552, %v595
  %v599 = vmul.f32 %v553, %v595
  %v600 = vld [vmem:[%s4 + $0x1] sm:$0x1]
  %v601 = vperm.slane %v600, 0
  %v602 = vmul.f32 %v596, %v601
  %v603 = vmul.f32 %v597, %v601
  %v604 = vmul.f32 %v598, %v601
  %v605 = vmul.f32 %v599, %v601
  %v606 = vld [vmem:[%s4 + $0x2] sm:$0x1]
  %v607 = vperm.slane %v606, 0
  %v608 = vadd.f32 %v602, %v607
  %v609 = vadd.f32 %v603, %v607
  %v610 = vadd.f32 %v604, %v607
  %v611 = vadd.f32 %v605, %v607
  %v612 = vpack.c.bf16 %v609, %v608
  %v613 = vpack.c.bf16 %v611, %v610
  %v614 = vld [vmem:[%s2] sm:$0xf]
  %v615 = vld [vmem:[%s2 + $0x4] sm:$0xf]
  %v616 = vld [vmem:[%s2 + $0x8] sm:$0xf]
  %v617 = vld [vmem:[%s2 + $0xc] sm:$0xf]
  %v618 = vld [vmem:[%s2 + $0x10] sm:$0xf]
  %v619 = vld [vmem:[%s2 + $0x14] sm:$0xf]
  %v620 = vld [vmem:[%s2 + $0x18] sm:$0xf]
  %v621 = vld [vmem:[%s2 + $0x1c] sm:$0xf]
  %v622 = vld [vmem:[%s2 + $0x20] sm:$0xf]
  %v623 = vld [vmem:[%s2 + $0x24] sm:$0xf]
  %v624 = vld [vmem:[%s2 + $0x28] sm:$0xf]
  %v625 = vld [vmem:[%s2 + $0x2c] sm:$0xf]
  %v626 = vld [vmem:[%s2 + $0x30] sm:$0xf]
  %v627 = vld [vmem:[%s2 + $0x34] sm:$0xf]
  %v628 = vld [vmem:[%s2 + $0x38] sm:$0xf]
  %v629 = vld [vmem:[%s2 + $0x3c] sm:$0xf]
  %v630 = vld [vmem:[%s4 + $0x3] sm:$0x1]
  %v631 = vperm.slane %v630, 0
  %v648 = vunpack.c.l.b16 %v614
  %v649 = vunpack.c.l.b16 %v615
  %v650 = vunpack.c.l.b16 %v616
  %v651 = vunpack.c.l.b16 %v617
  %v652 = vunpack.c.l.b16 %v618
  %v653 = vunpack.c.l.b16 %v619
  %v654 = vunpack.c.l.b16 %v620
  %v655 = vunpack.c.l.b16 %v621
  %v656 = vunpack.c.l.b16 %v622
  %v657 = vunpack.c.l.b16 %v623
  %v658 = vunpack.c.l.b16 %v624
  %v659 = vunpack.c.l.b16 %v625
  %v660 = vunpack.c.l.b16 %v626
  %v661 = vunpack.c.l.b16 %v627
  %v662 = vunpack.c.l.b16 %v628
  %v663 = vunpack.c.l.b16 %v629
  %v664 = vpack.c.b16 %v649, %v648
  %v665 = vpack.c.b16 %v651, %v650
  %v666 = vpack.c.b16 %v653, %v652
  %v667 = vpack.c.b16 %v655, %v654
  %v668 = vpack.c.b16 %v657, %v656
  %v669 = vpack.c.b16 %v659, %v658
  %v670 = vpack.c.b16 %v661, %v660
  %v671 = vpack.c.b16 %v663, %v662
  %680 = vmatpush.bf16.msra.mxu0 %v671
  %681 = vmatpush.bf16.msra.mxu0 %v670
  %682 = vmatpush.bf16.msra.mxu0 %v669
  %683 = vmatpush.bf16.msra.mxu0 %v668
  %684 = vmatpush.bf16.msra.mxu0 %v667
  %685 = vmatpush.bf16.msra.mxu0 %v666
  %686 = vmatpush.bf16.msra.mxu0 %v665
  %687 = vmatpush.bf16.msra.mxu0 %v664
  %688 = vmatmul.bf16.gmra.mxu0 %v612
  %v689 = vpop.f32.mrf.mxu0
  %v690 = vadd.f32 %v631, %v689
  %v691 = vpop.f32.mrf.mxu0
  %v692 = vadd.f32 %v631, %v691
  %693 = vmatmul.bf16.gmra.mxu0 %v613
  %v694 = vpop.f32.mrf.mxu0
  %v695 = vadd.f32 %v631, %v694
  %v696 = vpop.f32.mrf.mxu0
  %v697 = vadd.f32 %v631, %v696
  %698 = vdwg.mxu0
  %v699 = vmax.f32 %v690, 0.0
  %v700 = vmax.f32 %v692, 0.0
  %v701 = vmax.f32 %v695, 0.0
  %v702 = vmax.f32 %v697, 0.0
  %v703 = vpack.c.bf16 %v700, %v699
  %v704 = vpack.c.bf16 %v702, %v701
  %v705 = vld [vmem:[%s3] sm:$0xf]
  %v706 = vld [vmem:[%s3 + $0x4] sm:$0xf]
  %v707 = vld [vmem:[%s3 + $0x8] sm:$0xf]
  %v708 = vld [vmem:[%s3 + $0xc] sm:$0xf]
  %v709 = vld [vmem:[%s3 + $0x10] sm:$0xf]
  %v710 = vld [vmem:[%s3 + $0x14] sm:$0xf]
  %v711 = vld [vmem:[%s3 + $0x18] sm:$0xf]
  %v712 = vld [vmem:[%s3 + $0x1c] sm:$0xf]
  %v713 = vld [vmem:[%s3 + $0x20] sm:$0xf]
  %v714 = vld [vmem:[%s3 + $0x24] sm:$0xf]
  %v715 = vld [vmem:[%s3 + $0x28] sm:$0xf]
  %v716 = vld [vmem:[%s3 + $0x2c] sm:$0xf]
  %v717 = vld [vmem:[%s3 + $0x30] sm:$0xf]
  %v718 = vld [vmem:[%s3 + $0x34] sm:$0xf]
  %v719 = vld [vmem:[%s3 + $0x38] sm:$0xf]
  %v720 = vld [vmem:[%s3 + $0x3c] sm:$0xf]
  %v721 = vld [vmem:[%s4 + $0x4] sm:$0x1]
  %v722 = vperm.slane %v721, 0
  %v739 = vunpack.c.l.b16 %v705
  %v740 = vunpack.c.l.b16 %v706
  %v741 = vunpack.c.l.b16 %v707
  %v742 = vunpack.c.l.b16 %v708
  %v743 = vunpack.c.l.b16 %v709
  %v744 = vunpack.c.l.b16 %v710
  %v745 = vunpack.c.l.b16 %v711
  %v746 = vunpack.c.l.b16 %v712
  %v747 = vunpack.c.l.b16 %v713
  %v748 = vunpack.c.l.b16 %v714
  %v749 = vunpack.c.l.b16 %v715
  %v750 = vunpack.c.l.b16 %v716
  %v751 = vunpack.c.l.b16 %v717
  %v752 = vunpack.c.l.b16 %v718
  %v753 = vunpack.c.l.b16 %v719
  %v754 = vunpack.c.l.b16 %v720
  %v755 = vpack.c.b16 %v740, %v739
  %v756 = vpack.c.b16 %v742, %v741
  %v757 = vpack.c.b16 %v744, %v743
  %v758 = vpack.c.b16 %v746, %v745
  %v759 = vpack.c.b16 %v748, %v747
  %v760 = vpack.c.b16 %v750, %v749
  %v761 = vpack.c.b16 %v752, %v751
  %v762 = vpack.c.b16 %v754, %v753
  %771 = vmatpush.bf16.msra.mxu0 %v762
  %772 = vmatpush.bf16.msra.mxu0 %v761
  %773 = vmatpush.bf16.msra.mxu0 %v760
  %774 = vmatpush.bf16.msra.mxu0 %v759
  %775 = vmatpush.bf16.msra.mxu0 %v758
  %776 = vmatpush.bf16.msra.mxu0 %v757
  %777 = vmatpush.bf16.msra.mxu0 %v756
  %778 = vmatpush.bf16.msra.mxu0 %v755
  %779 = vmatmul.bf16.gmra.mxu0 %v703
  %v780 = vpop.f32.mrf.mxu0
  %v781 = vadd.f32 %v722, %v780
  %v782 = vpop.f32.mrf.mxu0
  %v783 = vadd.f32 %v722, %v782
  %784 = vmatmul.bf16.gmra.mxu0 %v704
  %v785 = vpop.f32.mrf.mxu0
  %v786 = vadd.f32 %v722, %v785
  %v787 = vpop.f32.mrf.mxu0
  %v788 = vadd.f32 %v722, %v787
  %789 = vdwg.mxu0
  %v790 = vadd.f32 %v781, %v608
  %v791 = vadd.f32 %v783, %v609
  %v792 = vadd.f32 %v786, %v610
  %v793 = vadd.f32 %v788, %v611
  %v794 = vadd.f32 %v790, %v791
  %v795 = vrot.slane %v794, 4
  %v796 = vadd.f32 %v794, %v795
  %v797 = vrot.slane %v796, 2
  %v798 = vadd.f32 %v796, %v797
  %v799 = vrot.slane %v798, 1
  %v800 = vadd.f32 %v798, %v799
  %v801 = vadd.f32 %v792, %v793
  %v802 = vrot.slane %v801, 4
  %v803 = vadd.f32 %v801, %v802
  %v804 = vrot.slane %v803, 2
  %v805 = vadd.f32 %v803, %v804
  %v806 = vrot.slane %v805, 1
  %v807 = vadd.f32 %v805, %v806
  %v808 = vmul.f32 %v800, %v547
  %v809 = vmul.f32 %v807, %v547
  %v810 = vsub.f32 %v790, %v808
  %v811 = vsub.f32 %v791, %v808
  %v812 = vsub.f32 %v792, %v809
  %v813 = vsub.f32 %v793, %v809
  %v814 = vmul.f32 %v810, %v810
  %v815 = vmul.f32 %v811, %v811
  %v816 = vmul.f32 %v812, %v812
  %v817 = vmul.f32 %v813, %v813
  %v818 = vadd.f32 %v814, %v815
  %v819 = vrot.slane %v818, 4
  %v820 = vadd.f32 %v818, %v819
  %v821 = vrot.slane %v820, 2
  %v822 = vadd.f32 %v820, %v821
  %v823 = vrot.slane %v822, 1
  %v824 = vadd.f32 %v822, %v823
  %v825 = vadd.f32 %v816, %v817
  %v826 = vrot.slane %v825, 4
  %v827 = vadd.f32 %v825, %v826
  %v828 = vrot.slane %v827, 2
  %v829 = vadd.f32 %v827, %v828
  %v830 = vrot.slane %v829, 1
  %v831 = vadd.f32 %v829, %v830
  %v832 = vmul.f32 %v824, %v547
  %v833 = vmul.f32 %v831, %v547
  %v834 = vadd.f32 %v832, 1e-05
  %v835 = vadd.f32 %v833, 1e-05
  %v836 = vrsqrt.pop %v834
  %v837 = vmul.f32 %v836, %v834
  %v838 = vmul.f32 %v837, %v836
  %v839 = vmul.f32 0.5, %v838
  %v840 = vsub.f32 1.5, %v839
  %v841 = vmul.f32 %v836, %v840
  %vm842 = vweird.f32 %v834
  %vm843 = vweird.f32 %v836
  %vm844 = vmor %vm842, %vm843
  %v845 = vsel %vm844, %v836, %v841
  %v846 = vrsqrt.pop %v835
  %v847 = vmul.f32 %v846, %v835
  %v848 = vmul.f32 %v847, %v846
  %v849 = vmul.f32 0.5, %v848
  %v850 = vsub.f32 1.5, %v849
  %v851 = vmul.f32 %v846, %v850
  %vm852 = vweird.f32 %v835
  %vm853 = vweird.f32 %v846
  %vm854 = vmor %vm852, %vm853
  %v855 = vsel %vm854, %v846, %v851
  %v856 = vmul.f32 %v810, %v845
  %v857 = vmul.f32 %v811, %v845
  %v858 = vmul.f32 %v812, %v855
  %v859 = vmul.f32 %v813, %v855
  %v860 = vld [vmem:[%s4 + $0x5] sm:$0x1]
  %v861 = vperm.slane %v860, 0
  %v862 = vmul.f32 %v856, %v861
  %v863 = vmul.f32 %v857, %v861
  %v864 = vmul.f32 %v858, %v861
  %v865 = vmul.f32 %v859, %v861
  %v866 = vld [vmem:[%s4 + $0x6] sm:$0x1]
  %v867 = vperm.slane %v866, 0
  %v868 = vadd.f32 %v862, %v867
  %v869 = vadd.f32 %v863, %v867
  %v870 = vadd.f32 %v864, %v867
  %v871 = vadd.f32 %v865, %v867
  %872 = vst [vmem:[%s5] sm:$0xff] %v868
  %873 = vst [vmem:[%s5 + $0x8] sm:$0xff] %v869
  %874 = vst [vmem:[%s5 + $0x10] sm:$0xff] %v870
  %875 = vst [vmem:[%s5 + $0x18] sm:$0xff] %v871
  // Predicated region
  $region22: #{tds_block_forward.1} parent=0 // pred_check
    _
  $region23: #{tds_block_forward.1} parent=0 // pred_check_branch
    %877 = sbr.rel (0) target = $region25
  $region24: #{tds_block_forward.1} parent=0 // pred_region
    _
  $region25: #{tds_block_forward.1} parent=0 // pred_fallthru
    _
  // Predicated region
  $region26: #{tds_block_forward.1} parent=0 // pred_check
    _
  $region27: #{tds_block_forward.1} parent=0 // pred_check_branch
    %879 = sbr.rel (0) target = $region29
  $region28: #{tds_block_forward.1} parent=0 // pred_region
    _
  $region29: #{tds_block_forward.1} parent=0 // pred_fallthru
    _

</llo_original>
